<compile_context>
chip_gen: v6e
topology: v6e:2x2x1
jax: 0.10.0
libtpu: 0.0.40
codegen_flags: <defaults>
</compile_context>

<pallas_src>
import jax
import jax.numpy as jnp
from jax import lax
from jax.experimental import pallas as pl
from jax.experimental.pallas import tpu as pltpu


def _mlp_kernel(x_ref, w1_ref, b1_ref, w2_ref, b2_ref, w3_ref, b3_ref, o_ref):
    """Fused 3-layer MLP on one batch tile; the batch lives on the 128-lane axis.

    x_ref : [tile_b, D] f32  (raw rows straight from HBM, cast in-kernel)
    w1_ref: [128, D]  compute dtype     w2_ref: [64, 128] compute dtype
    b1_ref: [128, 1] f32   b2_ref: [64, 1] f32   w3_ref: [64, 1] f32   b3_ref: [1, 1] f32
    o_ref : [1, tile_b] f32  (lane-dense output block)
    """
    cd = w1_ref.dtype
    xb = x_ref[...].astype(cd)                                   # in-kernel cast (VPU)

    # fc1: contract D of both operands -> [128, tile_b]; batch ends up on the lane axis
    # without ever materializing an x transpose in HBM.
    h1 = lax.dot_general(w1_ref[...], xb, (((1,), (1,)), ((), ())),
                         preferred_element_type=jnp.float32)
    h1 = jnp.maximum(h1 + b1_ref[...], 0.0).astype(cd)           # bias/ReLU in f32, stored once as cd

    # fc2: [64,128] @ [128,tile_b] -> [64,tile_b] (f32 accumulate on the MXU)
    h2 = jnp.dot(w2_ref[...], h1, preferred_element_type=jnp.float32)
    h2 = jnp.maximum(h2 + b2_ref[...], 0.0)                      # f32

    # fc3 (out_features = 1): VPU multiply + cross-sublane sum instead of an M=1 MXU matmul.
    out = jnp.sum(w3_ref[...] * h2, axis=0, keepdims=True) + b3_ref[...]   # [1, tile_b] f32
    o_ref[...] = out.astype(o_ref.dtype)


def _round_up(x, m):
    return -(-x // m) * m


def _choose_tile_b(batch, requested):
    """Multiple of 128, clamped to the batch, and <= half the (rounded) batch when possible
    so the grid has >= 2 blocks for v7x's two TensorCores."""
    tb = max(128, (min(requested, 8192) // 128) * 128)
    b_up = _round_up(batch, 128)
    tb = min(tb, b_up)                       # never tile (and pad) past the batch
    if b_up >= 256:                          # ensure >= 2 grid blocks when feasible
        tb = min(tb, max(128, (b_up // 2 // 128) * 128))
    return tb


def crop_prediction_forward(x, params, *, tile_b=4096, use_bf16=True):
    """x: [B, input_dim] float32. params: torch-style layout (w: [out, in], b: [out])."""
    B, D = x.shape
    cd = jnp.bfloat16 if use_bf16 else jnp.float32

    tb = _choose_tile_b(B, tile_b)
    n_blocks = pl.cdiv(B, tb)                # ragged last block handled by Pallas masking

    # Tiny weights stay VMEM-resident as fully replicated blocks.
    w1 = params["w1"].astype(cd)                              # [128, D]
    w2 = params["w2"].astype(cd)                              # [64, 128]
    b1 = params["b1"].reshape(128, 1).astype(jnp.float32)
    b2 = params["b2"].reshape(64, 1).astype(jnp.float32)
    w3 = params["w3"].reshape(64, 1).astype(jnp.float32)      # fc3 runs on the VPU in f32
    b3 = params["b3"].reshape(1, 1).astype(jnp.float32)

    full = lambda a: pl.BlockSpec(a.shape, lambda i: (0,) * a.ndim)

    # Explicit VMEM budget: double-buffered x tile (D=8 pads to 128 lanes), double-buffered
    # (1, tb) out tile (pads to 8 sublanes), whole-tile h1/h2 temporaries, weights + slack.
    vmem_est = (2 * tb * 128 * 4
                + 2 * 8 * tb * 4
                + tb * (128 * 4 + 128 * 2 + 64 * 4 + 64 * 4)
                + (2 << 20))
    vmem_limit = int(min(max(vmem_est, 16 << 20), 40 << 20))

    w_isz = jnp.dtype(cd).itemsize
    cost = pl.CostEstimate(
        flops=2 * B * (D * 128 + 128 * 64 + 64),
        transcendentals=0,
        bytes_accessed=(B * D * 4 + B * 4
                        + (128 * D + 64 * 128) * w_isz
                        + (128 + 64 + 64 + 1) * 4),
    )

    out = pl.pallas_call(
        _mlp_kernel,
        out_shape=jax.ShapeDtypeStruct((1, B), jnp.float32),
        grid_spec=pltpu.PrefetchScalarGridSpec(
            num_scalar_prefetch=0,
            grid=(n_blocks,),
            in_specs=[
                pl.BlockSpec((tb, D), lambda i: (i, 0)),      # raw f32 x rows, batch-major
                full(w1), full(b1),
                full(w2), full(b2),
                full(w3), full(b3),
            ],
            out_specs=pl.BlockSpec((1, tb), lambda i: (0, i)),  # lane-dense output tile
        ),
        compiler_params=pltpu.CompilerParams(
            dimension_semantics=("parallel",),                # shard batch grid across TCs
            vmem_limit_bytes=vmem_limit,
        ),
        cost_estimate=cost,
    )(x, w1, b1, w2, b2, w3, b3)

    # Module's [B, 1] output (ragged tail columns were never written / are sliced away).
    return out[0, :].reshape(B, 1)


def init_params(key, input_dim):
    """Deterministic synthetic init; torch nn.Linear layout (w: [out, in], b: [out])."""
    k1, k2, k3, k4, k5, k6 = jax.random.split(key, 6)
    return {
        "w1": jax.random.normal(k1, (128, input_dim), jnp.float32) * 0.1,
        "b1": jax.random.normal(k2, (128,), jnp.float32) * 0.1,
        "w2": jax.random.normal(k3, (64, 128), jnp.float32) * 0.1,
        "b2": jax.random.normal(k4, (64,), jnp.float32) * 0.1,
        "w3": jax.random.normal(k5, (1, 64), jnp.float32) * 0.1,
        "b3": jax.random.normal(k6, (1,), jnp.float32) * 0.1,
    }


def reference_forward(x, p):
    h1 = jnp.maximum(x @ p["w1"].T + p["b1"], 0.0)
    h2 = jnp.maximum(h1 @ p["w2"].T + p["b2"], 0.0)
    return h2 @ p["w3"].T + p["b3"]


if __name__ == "__main__":
    key = jax.random.PRNGKey(0)
    kx, kp = jax.random.split(key)

    batch = 200        # intentionally ragged: exercises boundary-block handling (2 blocks)
    input_dim = 8      # soil/climate features per sample
    x = jax.random.normal(kx, (batch, input_dim), jnp.float32)
    params = init_params(kp, input_dim)

    ref = reference_forward(x, params)

    # f32 path: exact check of the in-kernel transposed math.
    out_f32 = jax.block_until_ready(crop_prediction_forward(x, params, use_bf16=False))
    assert out_f32.shape == (batch, 1)
    assert jnp.allclose(out_f32, ref, atol=1e-4, rtol=1e-4), "f32 kernel mismatch vs reference"

    # Default bf16 MXU-operand path (f32 accumulate).
    out_bf16 = jax.block_until_ready(crop_prediction_forward(x, params))
    assert out_bf16.shape == (batch, 1)
    assert jnp.allclose(out_bf16, ref, atol=3e-2, rtol=3e-2), "bf16 kernel mismatch vs reference"

    print("KERNEL_OK")
</pallas_src>

<mosaic_0001>
module attributes {stable_mosaic.version = 11 : i64} {
  func.func @_mlp_kernel(%arg0: i32, %arg1: memref<128x8xf32, #tpu.memory_space<vmem>>, %arg2: memref<128x8xf32, #tpu.memory_space<vmem>>, %arg3: memref<128x1xf32, #tpu.memory_space<vmem>>, %arg4: memref<64x128xf32, #tpu.memory_space<vmem>>, %arg5: memref<64x1xf32, #tpu.memory_space<vmem>>, %arg6: memref<64x1xf32, #tpu.memory_space<vmem>>, %arg7: memref<1x1xf32, #tpu.memory_space<vmem>>, %arg8: memref<1x128xf32, #tpu.memory_space<vmem>>) attributes {dimension_semantics = [#tpu.dimension_semantics<parallel>], iteration_bounds = array<i64: 2>, scalar_prefetch = 0 : i64, scratch_operands = 0 : i64, tpu.core_type = #tpu.core_type<tc>, window_params = [{transform_indices = @transform_0, window_bounds = array<i64: 128, 8>}, {pipeline_mode = #tpu.pipeline_mode<synchronous>, transform_indices = @transform_1, window_bounds = array<i64: 128, 8>}, {pipeline_mode = #tpu.pipeline_mode<synchronous>, transform_indices = @transform_2, window_bounds = array<i64: 128, 1>}, {pipeline_mode = #tpu.pipeline_mode<synchronous>, transform_indices = @transform_3, window_bounds = array<i64: 64, 128>}, {pipeline_mode = #tpu.pipeline_mode<synchronous>, transform_indices = @transform_4, window_bounds = array<i64: 64, 1>}, {pipeline_mode = #tpu.pipeline_mode<synchronous>, transform_indices = @transform_5, window_bounds = array<i64: 64, 1>}, {pipeline_mode = #tpu.pipeline_mode<synchronous>, transform_indices = @transform_6, window_bounds = array<i64: 1, 1>}, {transform_indices = @transform_7, window_bounds = array<i64: 1, 128>}]} {
    %c0 = arith.constant 0 : index
    %c0_0 = arith.constant 0 : index
    %0 = vector.load %arg1[%c0, %c0_0] : memref<128x8xf32, #tpu.memory_space<vmem>>, vector<128x8xf32>
    %c0_1 = arith.constant 0 : index
    %c0_2 = arith.constant 0 : index
    %1 = vector.load %arg2[%c0_1, %c0_2] : memref<128x8xf32, #tpu.memory_space<vmem>>, vector<128x8xf32>
    %cst = arith.constant dense<0.000000e+00> : vector<128x128xf32>
    %2 = tpu.matmul %1, %0, %cst {dimension_numbers = #tpu.dot_dimension_numbers<[1], [1], [0], [0], [0, 0, 1, 0], [], []>} : vector<128x8xf32>, vector<128x8xf32>, vector<128x128xf32> -> vector<128x128xf32>
    %c0_3 = arith.constant 0 : index
    %c0_4 = arith.constant 0 : index
    %3 = vector.load %arg3[%c0_3, %c0_4] : memref<128x1xf32, #tpu.memory_space<vmem>>, vector<128x1xf32>
    %4 = vector.broadcast %3 : vector<128x1xf32> to vector<128x128xf32>
    %5 = arith.addf %2, %4 : vector<128x128xf32>
    %cst_5 = arith.constant 0.000000e+00 : f32
    %6 = vector.broadcast %cst_5 : f32 to vector<128x128xf32>
    %7 = arith.maximumf %5, %6 : vector<128x128xf32>
    %c0_6 = arith.constant 0 : index
    %c0_7 = arith.constant 0 : index
    %8 = vector.load %arg4[%c0_6, %c0_7] : memref<64x128xf32, #tpu.memory_space<vmem>>, vector<64x128xf32>
    %cst_8 = arith.constant dense<0.000000e+00> : vector<64x128xf32>
    %9 = tpu.matmul %8, %7, %cst_8 {dimension_numbers = #tpu.dot_dimension_numbers<[1], [0], [0], [1], [0, 0, 1, 1], [], []>} : vector<64x128xf32>, vector<128x128xf32>, vector<64x128xf32> -> vector<64x128xf32>
    %c0_9 = arith.constant 0 : index
    %c0_10 = arith.constant 0 : index
    %10 = vector.load %arg5[%c0_9, %c0_10] : memref<64x1xf32, #tpu.memory_space<vmem>>, vector<64x1xf32>
    %11 = vector.broadcast %10 : vector<64x1xf32> to vector<64x128xf32>
    %12 = arith.addf %9, %11 : vector<64x128xf32>
    %cst_11 = arith.constant 0.000000e+00 : f32
    %13 = vector.broadcast %cst_11 : f32 to vector<64x128xf32>
    %14 = arith.maximumf %12, %13 : vector<64x128xf32>
    %c0_12 = arith.constant 0 : index
    %c0_13 = arith.constant 0 : index
    %15 = vector.load %arg6[%c0_12, %c0_13] : memref<64x1xf32, #tpu.memory_space<vmem>>, vector<64x1xf32>
    %16 = vector.broadcast %15 : vector<64x1xf32> to vector<64x128xf32>
    %17 = arith.mulf %16, %14 : vector<64x128xf32>
    %cst_14 = arith.constant dense<0.000000e+00> : vector<128xf32>
    %18 = vector.multi_reduction <add>, %17, %cst_14 [0] : vector<64x128xf32> to vector<128xf32>
    %19 = vector.shape_cast %18 : vector<128xf32> to vector<1x128xf32>
    %c0_15 = arith.constant 0 : index
    %c0_16 = arith.constant 0 : index
    %20 = vector.load %arg7[%c0_15, %c0_16] : memref<1x1xf32, #tpu.memory_space<vmem>>, vector<1x1xf32>
    %21 = vector.broadcast %20 : vector<1x1xf32> to vector<1x128xf32>
    %22 = arith.addf %19, %21 : vector<1x128xf32>
    %c0_17 = arith.constant 0 : index
    %c0_18 = arith.constant 0 : index
    %23 = vector.load %arg8[%c0_17, %c0_18] : memref<1x128xf32, #tpu.memory_space<vmem>>, vector<1x128xf32>
    tpu.vector_store %arg8[%c0_17, %c0_18], %22 {strides = array<i32>} : memref<1x128xf32, #tpu.memory_space<vmem>>, vector<1x128xf32>,
    return
  }
  func.func @transform_0(%arg0: i32) -> (i32, i32) {
    %c0_i32 = arith.constant 0 : i32
    %c0_i32_0 = arith.constant 0 : i32
    return %arg0, %c0_i32 : i32, i32
  }
  func.func @transform_1(%arg0: i32) -> (i32, i32) {
    %c0_i32 = arith.constant 0 : i32
    %c0_i32_0 = arith.constant 0 : i32
    %c0_i32_1 = arith.constant 0 : i32
    return %c0_i32, %c0_i32_0 : i32, i32
  }
  func.func @transform_2(%arg0: i32) -> (i32, i32) {
    %c0_i32 = arith.constant 0 : i32
    %c0_i32_0 = arith.constant 0 : i32
    %c0_i32_1 = arith.constant 0 : i32
    return %c0_i32, %c0_i32_0 : i32, i32
  }
  func.func @transform_3(%arg0: i32) -> (i32, i32) {
    %c0_i32 = arith.constant 0 : i32
    %c0_i32_0 = arith.constant 0 : i32
    %c0_i32_1 = arith.constant 0 : i32
    return %c0_i32, %c0_i32_0 : i32, i32
  }
  func.func @transform_4(%arg0: i32) -> (i32, i32) {
    %c0_i32 = arith.constant 0 : i32
    %c0_i32_0 = arith.constant 0 : i32
    %c0_i32_1 = arith.constant 0 : i32
    return %c0_i32, %c0_i32_0 : i32, i32
  }
  func.func @transform_5(%arg0: i32) -> (i32, i32) {
    %c0_i32 = arith.constant 0 : i32
    %c0_i32_0 = arith.constant 0 : i32
    %c0_i32_1 = arith.constant 0 : i32
    return %c0_i32, %c0_i32_0 : i32, i32
  }
  func.func @transform_6(%arg0: i32) -> (i32, i32) {
    %c0_i32 = arith.constant 0 : i32
    %c0_i32_0 = arith.constant 0 : i32
    %c0_i32_1 = arith.constant 0 : i32
    return %c0_i32, %c0_i32_0 : i32, i32
  }
  func.func @transform_7(%arg0: i32) -> (i32, i32) {
    %c0_i32 = arith.constant 0 : i32
    %c0_i32_0 = arith.constant 0 : i32
    return %c0_i32, %arg0 : i32, i32
  }
}

</mosaic_0001>

<llo_original>
// kernel: tpu_custom_call.1
$region0: #{tpu_custom_call.1}
  #allocation0 [shape = 'u32[]', space=smem, size = 0x4, offset = 0x4, fixed_abs, tag = 'smem constant byte address 0x4 - core index']
  #allocation1 [shape = 'u32[144,128]{1,0:T(1,128)}', space=vmem, size = 0x12000, scoped, tag = 'internal scratch']
  #allocation2 [shape = 'f32[1,1]{1,0:T(1,128)S(1)}', space=vmem, size = 0x200, scoped, tag = 'scoped memory for tpu_custom_call.1']
  %s0 = inlined_call_operand.vmem [shape: f32[200,8], index: 0, kind: input, shape index: {}]
  %s1 = inlined_call_operand.vmem [shape: f32[128,8], index: 1, kind: input, shape index: {}]
  %s2 = inlined_call_operand.vmem [shape: f32[128,1], index: 2, kind: input, shape index: {}]
  %s3 = inlined_call_operand.vmem [shape: f32[64,128], index: 3, kind: input, shape index: {}]
  %s4 = inlined_call_operand.vmem [shape: f32[64,1], index: 4, kind: input, shape index: {}]
  %s5 = inlined_call_operand.vmem [shape: f32[64,1], index: 5, kind: input, shape index: {}]
  %s6 = inlined_call_operand.<no memory space> [shape: f32[1,1], index: 6, kind: input, shape index: {}]
  %s7 = inlined_call_operand.hbm [shape: f32[1,200], index: 7, kind: output, shape index: {}]
  %s8 = sld [smem:[#allocation0]]
  $region61: #{tpu_custom_call.1} parent=0
    _
  %s10 = ssub.s32 1, %s8
  %s11 = scalar_select 0, %s10, %s8
  %v12 = vstv %s6
  %13 = vst [vmem:[#allocation2] sm:$0x1] %v12
  $region1: #{tpu_custom_call.1} parent=0
    #allocation3 [shape = 'u8[1024]{0}', space=vmem, size = 0x400, scoped, tag = 'output window, operand 0']
    #allocation4 [shape = 's32[2]{0}', space=sflag, size = 0x8, scoped, tag = 'scoped memory for tpu_custom_call.1']
    %14 = vsyncpa [#allocation4], 0
    %s15 = scalar_lea.sflag [#allocation4], 1
    %16 = vsyncpa %s15, 0
    loop: start=0, step=1, limit=4
    $region2: #{tpu_custom_call.1} parent=1 // loop_pre_header
      _
    $region3: #{tpu_custom_call.1} parent=1 // loop_header
      %s18 = sphi 0, %s22
      %p19 = scmp.ge.s32.totalorder %s18, 4
      %s28 = sphi 0, %s30
      %s31 = sphi 0, %s28
      %s32 = sphi 0, %s31
      %s48 = sphi 0, %s32
      %s52 = sphi 0, %s52
      %s54 = sphi 0, %s52
      %s55 = sphi 0, %s54
      %s69 = sphi 0, %s55
      %s73 = sphi 0, %s73
      %s75 = sphi 0, %s73
      %s76 = sphi 0, %s75
      %s90 = sphi 0, %s76
      %s94 = sphi 0, %s94
      %s96 = sphi 0, %s94
      %s97 = sphi 0, %s96
      %s111 = sphi 0, %s97
      %s115 = sphi 0, %s115
      %s117 = sphi 0, %s115
      %s118 = sphi 0, %s117
      %s132 = sphi 0, %s118
      %s136 = sphi 0, %s136
      %s138 = sphi 0, %s136
      %s139 = sphi 0, %s138
      %s153 = sphi 0, %s139
      %s157 = sphi 0, %s157
      %s159 = sphi 0, %s157
      %s160 = sphi 0, %s159
      %s174 = sphi 0, %s160
      %s180 = sphi 0, %s182
      %s183 = sphi 0, %s180
      %s184 = sphi 0, %s183
      %s200 = sphi 0, %s184
    $region4: #{tpu_custom_call.1} parent=1 // loop_header_branch
      %21 = sbr.rel (%p19) target = $region8
    $region5: #{tpu_custom_call.1} parent=1 // loop_body
      %s23 = ssub.s32 %s18, 1
      %s24 = ssub.s32 %s18, 2
      %s25 = sadd.s32 %s18, 1
      %s26 = ssub.s32 %s18, %s25
      %p27 = scmp.eq.s32.totalorder %s26, 0
      %s29 = sadd.s32 %s28, 1
      %s30 = scalar_select %p27, %s28, %s29
      %p33 = pneg %p27
      %p34 = scmp.eq.s32.totalorder %s18, 1
      %p35 = por %p33, %p34
      %p36 = scmp.ne.s32.totalorder %s28, %s31
      %p37 = scmp.eq.s32.totalorder %s18, 0
      %p38 = por %p36, %p37
      %p39 = scmp.ne.s32.totalorder %s28, %s31
      %p40 = scmp.eq.s32.totalorder %s23, 1
      %p41 = por %p39, %p40
      %p42 = scmp.ne.s32.totalorder %s31, %s32
      %p43 = scmp.eq.s32.totalorder %s23, 0
      %p44 = por %p42, %p43
      %p45 = scmp.ne.s32.totalorder %s31, %s32
      %p46 = scmp.eq.s32.totalorder %s24, 1
      %p47 = por %p45, %p46
      %p49 = scmp.ne.s32.totalorder %s32, %s48
      %p50 = scmp.eq.s32.totalorder %s24, 0
      %p51 = por %p49, %p50
      %s53 = sadd.s32 %s52, 1
      %p56 = scmp.eq.s32.totalorder %s18, 1
      %p57 = scmp.ne.s32.totalorder %s52, %s54
      %p58 = scmp.eq.s32.totalorder %s18, 0
      %p59 = por %p57, %p58
      %p60 = scmp.ne.s32.totalorder %s52, %s54
      %p61 = scmp.eq.s32.totalorder %s23, 1
      %p62 = por %p60, %p61
      %p63 = scmp.ne.s32.totalorder %s54, %s55
      %p64 = scmp.eq.s32.totalorder %s23, 0
      %p65 = por %p63, %p64
      %p66 = scmp.ne.s32.totalorder %s54, %s55
      %p67 = scmp.eq.s32.totalorder %s24, 1
      %p68 = por %p66, %p67
      %p70 = scmp.ne.s32.totalorder %s55, %s69
      %p71 = scmp.eq.s32.totalorder %s24, 0
      %p72 = por %p70, %p71
      %s74 = sadd.s32 %s73, 1
      %p77 = scmp.eq.s32.totalorder %s18, 1
      %p78 = scmp.ne.s32.totalorder %s73, %s75
      %p79 = scmp.eq.s32.totalorder %s18, 0
      %p80 = por %p78, %p79
      %p81 = scmp.ne.s32.totalorder %s73, %s75
      %p82 = scmp.eq.s32.totalorder %s23, 1
      %p83 = por %p81, %p82
      %p84 = scmp.ne.s32.totalorder %s75, %s76
      %p85 = scmp.eq.s32.totalorder %s23, 0
      %p86 = por %p84, %p85
      %p87 = scmp.ne.s32.totalorder %s75, %s76
      %p88 = scmp.eq.s32.totalorder %s24, 1
      %p89 = por %p87, %p88
      %p91 = scmp.ne.s32.totalorder %s76, %s90
      %p92 = scmp.eq.s32.totalorder %s24, 0
      %p93 = por %p91, %p92
      %s95 = sadd.s32 %s94, 1
      %p98 = scmp.eq.s32.totalorder %s18, 1
      %p99 = scmp.ne.s32.totalorder %s94, %s96
      %p100 = scmp.eq.s32.totalorder %s18, 0
      %p101 = por %p99, %p100
      %p102 = scmp.ne.s32.totalorder %s94, %s96
      %p103 = scmp.eq.s32.totalorder %s23, 1
      %p104 = por %p102, %p103
      %p105 = scmp.ne.s32.totalorder %s96, %s97
      %p106 = scmp.eq.s32.totalorder %s23, 0
      %p107 = por %p105, %p106
      %p108 = scmp.ne.s32.totalorder %s96, %s97
      %p109 = scmp.eq.s32.totalorder %s24, 1
      %p110 = por %p108, %p109
      %p112 = scmp.ne.s32.totalorder %s97, %s111
      %p113 = scmp.eq.s32.totalorder %s24, 0
      %p114 = por %p112, %p113
      %s116 = sadd.s32 %s115, 1
      %p119 = scmp.eq.s32.totalorder %s18, 1
      %p120 = scmp.ne.s32.totalorder %s115, %s117
      %p121 = scmp.eq.s32.totalorder %s18, 0
      %p122 = por %p120, %p121
      %p123 = scmp.ne.s32.totalorder %s115, %s117
      %p124 = scmp.eq.s32.totalorder %s23, 1
      %p125 = por %p123, %p124
      %p126 = scmp.ne.s32.totalorder %s117, %s118
      %p127 = scmp.eq.s32.totalorder %s23, 0
      %p128 = por %p126, %p127
      %p129 = scmp.ne.s32.totalorder %s117, %s118
      %p130 = scmp.eq.s32.totalorder %s24, 1
      %p131 = por %p129, %p130
      %p133 = scmp.ne.s32.totalorder %s118, %s132
      %p134 = scmp.eq.s32.totalorder %s24, 0
      %p135 = por %p133, %p134
      %s137 = sadd.s32 %s136, 1
      %p140 = scmp.eq.s32.totalorder %s18, 1
      %p141 = scmp.ne.s32.totalorder %s136, %s138
      %p142 = scmp.eq.s32.totalorder %s18, 0
      %p143 = por %p141, %p142
      %p144 = scmp.ne.s32.totalorder %s136, %s138
      %p145 = scmp.eq.s32.totalorder %s23, 1
      %p146 = por %p144, %p145
      %p147 = scmp.ne.s32.totalorder %s138, %s139
      %p148 = scmp.eq.s32.totalorder %s23, 0
      %p149 = por %p147, %p148
      %p150 = scmp.ne.s32.totalorder %s138, %s139
      %p151 = scmp.eq.s32.totalorder %s24, 1
      %p152 = por %p150, %p151
      %p154 = scmp.ne.s32.totalorder %s139, %s153
      %p155 = scmp.eq.s32.totalorder %s24, 0
      %p156 = por %p154, %p155
      %s158 = sadd.s32 %s157, 1
      %p161 = scmp.eq.s32.totalorder %s18, 1
      %p162 = scmp.ne.s32.totalorder %s157, %s159
      %p163 = scmp.eq.s32.totalorder %s18, 0
      %p164 = por %p162, %p163
      %p165 = scmp.ne.s32.totalorder %s157, %s159
      %p166 = scmp.eq.s32.totalorder %s23, 1
      %p167 = por %p165, %p166
      %p168 = scmp.ne.s32.totalorder %s159, %s160
      %p169 = scmp.eq.s32.totalorder %s23, 0
      %p170 = por %p168, %p169
      %p171 = scmp.ne.s32.totalorder %s159, %s160
      %p172 = scmp.eq.s32.totalorder %s24, 1
      %p173 = por %p171, %p172
      %p175 = scmp.ne.s32.totalorder %s160, %s174
      %p176 = scmp.eq.s32.totalorder %s24, 0
      %p177 = por %p175, %p176
      %s178 = ssub.s32 %s18, %s25
      %p179 = scmp.eq.s32.totalorder %s178, 0
      %s181 = sadd.s32 %s180, 1
      %s182 = scalar_select %p179, %s180, %s181
      %p185 = pneg %p179
      %p186 = scmp.eq.s32.totalorder %s18, 1
      %p187 = por %p185, %p186
      %p188 = scmp.ne.s32.totalorder %s180, %s183
      %p189 = scmp.eq.s32.totalorder %s18, 0
      %p190 = por %p188, %p189
      %p191 = scmp.ne.s32.totalorder %s180, %s183
      %p192 = scmp.eq.s32.totalorder %s23, 1
      %p193 = por %p191, %p192
      %p194 = scmp.ne.s32.totalorder %s183, %s184
      %p195 = scmp.eq.s32.totalorder %s23, 0
      %p196 = por %p194, %p195
      %p197 = scmp.ne.s32.totalorder %s183, %s184
      %p198 = scmp.eq.s32.totalorder %s24, 1
      %p199 = por %p197, %p198
      %p201 = scmp.ne.s32.totalorder %s184, %s200
      %p202 = scmp.eq.s32.totalorder %s24, 0
      %p203 = por %p201, %p202
      %p204 = scmp.le.s32.totalorder 1, %s18
      %p205 = scmp.lt.s32.totalorder %s18, 3
      %p206 = pnand %p204, %p205
      %p207 = pneg %p206
      // Predicated region
      $region9: #{tpu_custom_call.1} parent=5 // pred_check
        _
      $region10: #{tpu_custom_call.1} parent=5 // pred_check_branch
        %209 = sbr.rel (%p206) target = $region12
      $region11: #{tpu_custom_call.1} parent=5 // pred_region
        %s210 = ssub.s32 %s18, 1
        // Predicated region
        $region13: #{tpu_custom_call.1} parent=11 // pred_check
          %p211 = pneg %p65
        $region14: #{tpu_custom_call.1} parent=11 // pred_check_branch
          %213 = sbr.rel (%p211) target = $region16
        $region15: #{tpu_custom_call.1} parent=11 // pred_region
          _
        $region16: #{tpu_custom_call.1} parent=11 // pred_fallthru
          _
        // Predicated region
        $region17: #{tpu_custom_call.1} parent=11 // pred_check
          %p214 = pneg %p86
        $region18: #{tpu_custom_call.1} parent=11 // pred_check_branch
          %216 = sbr.rel (%p214) target = $region20
        $region19: #{tpu_custom_call.1} parent=11 // pred_region
          _
        $region20: #{tpu_custom_call.1} parent=11 // pred_fallthru
          _
        // Predicated region
        $region21: #{tpu_custom_call.1} parent=11 // pred_check
          %p217 = pneg %p107
        $region22: #{tpu_custom_call.1} parent=11 // pred_check_branch
          %219 = sbr.rel (%p217) target = $region24
        $region23: #{tpu_custom_call.1} parent=11 // pred_region
          _
        $region24: #{tpu_custom_call.1} parent=11 // pred_fallthru
          _
        // Predicated region
        $region25: #{tpu_custom_call.1} parent=11 // pred_check
          %p220 = pneg %p128
        $region26: #{tpu_custom_call.1} parent=11 // pred_check_branch
          %222 = sbr.rel (%p220) target = $region28
        $region27: #{tpu_custom_call.1} parent=11 // pred_region
          _
        $region28: #{tpu_custom_call.1} parent=11 // pred_fallthru
          _
        // Predicated region
        $region29: #{tpu_custom_call.1} parent=11 // pred_check
          %p223 = pneg %p149
        $region30: #{tpu_custom_call.1} parent=11 // pred_check_branch
          %225 = sbr.rel (%p223) target = $region32
        $region31: #{tpu_custom_call.1} parent=11 // pred_region
          _
        $region32: #{tpu_custom_call.1} parent=11 // pred_fallthru
          _
        // Predicated region
        $region33: #{tpu_custom_call.1} parent=11 // pred_check
          %p226 = pneg %p170
        $region34: #{tpu_custom_call.1} parent=11 // pred_check_branch
          %228 = sbr.rel (%p226) target = $region36
        $region35: #{tpu_custom_call.1} parent=11 // pred_region
          _
        $region36: #{tpu_custom_call.1} parent=11 // pred_fallthru
          _
      $region12: #{tpu_custom_call.1} parent=5 // pred_fallthru
        _
      %p229 = scmp.lt.s32.totalorder %s18, 2
      // Predicated region
      $region37: #{tpu_custom_call.1} parent=5 // pred_check
        %p230 = pneg %p229
      $region38: #{tpu_custom_call.1} parent=5 // pred_check_branch
        %232 = sbr.rel (%p230) target = $region40
      $region39: #{tpu_custom_call.1} parent=5 // pred_region
        // Predicated region
        $region41: #{tpu_custom_call.1} parent=39 // pred_check
          %p233 = pneg %p38
        $region42: #{tpu_custom_call.1} parent=39 // pred_check_branch
          %235 = sbr.rel (%p233) target = $region44
        $region43: #{tpu_custom_call.1} parent=39 // pred_region
          %s236 = smul.u32 16, %s18
          %s237 = ssub.s32 25, %s236
          %p238 = scmp.lt.s32.totalorder %s237, 16
          %s239 = scalar_select %p238, %s237, 16
          %s240 = smul.u32 128, %s239
          %p241 = scmp.lt.s32.totalorder %s236, 24
          %s242 = scalar_select %p241, %s236, 24
          %s243 = smul.addr %s242, 8
          %s244 = scalar_lea.vmem %s0, %s243
          %s245 = smul.u32 16, %s18
          %s246 = ssub.s32 25, %s245
          %p247 = scmp.lt.s32.totalorder %s246, 16
          %s248 = scalar_select %p247, %s246, 16
          %s249 = smul.u32 128, %s248
        $region44: #{tpu_custom_call.1} parent=39 // pred_fallthru
          _
      $region40: #{tpu_custom_call.1} parent=5 // pred_fallthru
        _
      %p250 = scmp.le.s32.totalorder 1, %s18
      %p251 = scmp.lt.s32.totalorder %s18, 3
      %p252 = pnand %p250, %p251
      %p253 = pneg %p252
      // Predicated region
      $region45: #{tpu_custom_call.1} parent=5 // pred_check
        _
      $region46: #{tpu_custom_call.1} parent=5 // pred_check_branch
        %255 = sbr.rel (%p252) target = $region48
      $region47: #{tpu_custom_call.1} parent=5 // pred_region
        %s256 = ssub.s32 %s18, 1
        %s257 = smul.u32 16, %s23
        %s258 = ssub.s32 25, %s257
        %p259 = scmp.lt.s32.totalorder %s258, 16
        %s260 = scalar_select %p259, %s258, 16
        %s261 = smul.u32 128, %s260
        %p262 = scmp.lt.s32.totalorder %s257, 24
        %s263 = scalar_select %p262, %s257, 24
        %s264 = smul.addr %s263, 8
        %s265 = scalar_lea.vmem %s0, %s264
        %p266 = pneg %p44
        %p267 = pneg %p41
        %p268 = pneg %p65
        %p269 = pneg %p62
        %p270 = pneg %p86
        %p271 = pneg %p83
        %p272 = pneg %p107
        %p273 = pneg %p104
        %p274 = pneg %p128
        %p275 = pneg %p125
        %p276 = pneg %p149
        %p277 = pneg %p146
        %p278 = pneg %p170
        %p279 = pneg %p167
        %p280 = pneg %p196
        %p281 = pneg %p193
        %s282 = sand.u32 %s183, 1
        %s283 = scalar_lea.sflag [#allocation4], %s282
        %s284 = sand.u32 %s183, 1
        %s285 = scalar_lea.vmem [#allocation3], %s284
        %s286 = smul.u32 16, %s23
        %s287 = ssub.s32 25, %s286
        %p288 = scmp.lt.s32.totalorder %s287, 16
        %s289 = scalar_select %p288, %s287, 16
        %s290 = smul.u32 128, %s289
        %p291 = scmp.lt.s32.totalorder %s286, 24
        %s292 = scalar_select %p291, %s286, 24
        %s293 = smul.addr %s292, 8
        %s294 = scalar_lea.vmem %s0, %s293
        %s295 = smul.u32 16, %s23
        %s296 = ssub.s32 25, %s295
        %p297 = scmp.lt.s32.totalorder %s296, 16
        %s298 = scalar_select %p297, %s296, 16
        %s299 = smul.u32 128, %s298
        %v300 = vld [vmem:[%s294] sm:$0xff]
        %v301 = vld [vmem:[%s294 + $0x8] sm:$0xff]
        %v302 = vld [vmem:[%s294 + $0x10] sm:$0xff]
        %v303 = vld [vmem:[%s294 + $0x18] sm:$0xff]
        %v304 = vld [vmem:[%s294 + $0x20] sm:$0xff]
        %v305 = vld [vmem:[%s294 + $0x28] sm:$0xff]
        %v306 = vld [vmem:[%s294 + $0x30] sm:$0xff]
        %v307 = vld [vmem:[%s294 + $0x38] sm:$0xff]
        %v308 = vld [vmem:[%s294 + $0x40] sm:$0xff]
        %v309 = vld [vmem:[%s294 + $0x48] sm:$0xff]
        %v310 = vld [vmem:[%s294 + $0x50] sm:$0xff]
        %v311 = vld [vmem:[%s294 + $0x58] sm:$0xff]
        %v312 = vld [vmem:[%s294 + $0x60] sm:$0xff]
        %v313 = vld [vmem:[%s294 + $0x68] sm:$0xff]
        %v314 = vld [vmem:[%s294 + $0x70] sm:$0xff]
        %v315 = vld [vmem:[%s294 + $0x78] sm:$0xff]
        %v316 = vld [vmem:[%s1] sm:$0xff]
        %v317 = vld [vmem:[%s1 + $0x8] sm:$0xff]
        %v318 = vld [vmem:[%s1 + $0x10] sm:$0xff]
        %v319 = vld [vmem:[%s1 + $0x18] sm:$0xff]
        %v320 = vld [vmem:[%s1 + $0x20] sm:$0xff]
        %v321 = vld [vmem:[%s1 + $0x28] sm:$0xff]
        %v322 = vld [vmem:[%s1 + $0x30] sm:$0xff]
        %v323 = vld [vmem:[%s1 + $0x38] sm:$0xff]
        %v324 = vld [vmem:[%s1 + $0x40] sm:$0xff]
        %v325 = vld [vmem:[%s1 + $0x48] sm:$0xff]
        %v326 = vld [vmem:[%s1 + $0x50] sm:$0xff]
        %v327 = vld [vmem:[%s1 + $0x58] sm:$0xff]
        %v328 = vld [vmem:[%s1 + $0x60] sm:$0xff]
        %v329 = vld [vmem:[%s1 + $0x68] sm:$0xff]
        %v330 = vld [vmem:[%s1 + $0x70] sm:$0xff]
        %v331 = vld [vmem:[%s1 + $0x78] sm:$0xff]
        %v332 = vld [vmem:[%s2] sm:$0xff]
        %v333 = vld [vmem:[%s2 + $0x8] sm:$0xff]
        %v334 = vld [vmem:[%s2 + $0x10] sm:$0xff]
        %v335 = vld [vmem:[%s2 + $0x18] sm:$0xff]
        %v336 = vld [vmem:[%s2 + $0x20] sm:$0xff]
        %v337 = vld [vmem:[%s2 + $0x28] sm:$0xff]
        %v338 = vld [vmem:[%s2 + $0x30] sm:$0xff]
        %v339 = vld [vmem:[%s2 + $0x38] sm:$0xff]
        %v340 = vld [vmem:[%s2 + $0x40] sm:$0xff]
        %v341 = vld [vmem:[%s2 + $0x48] sm:$0xff]
        %v342 = vld [vmem:[%s2 + $0x50] sm:$0xff]
        %v343 = vld [vmem:[%s2 + $0x58] sm:$0xff]
        %v344 = vld [vmem:[%s2 + $0x60] sm:$0xff]
        %v345 = vld [vmem:[%s2 + $0x68] sm:$0xff]
        %v346 = vld [vmem:[%s2 + $0x70] sm:$0xff]
        %v347 = vld [vmem:[%s2 + $0x78] sm:$0xff]
        %349 = vset.pattern.permute.xlu0 0
        %350 = vperm.xlu0 %349, %v332
        %v351 = vpop.permute.xlu0 %350
        %354 = vset.pattern.permute.xlu0 0
        %355 = vperm.xlu0 %354, %v333
        %v356 = vpop.permute.xlu0 %355
        %359 = vset.pattern.permute.xlu0 0
        %360 = vperm.xlu0 %359, %v334
        %v361 = vpop.permute.xlu0 %360
        %364 = vset.pattern.permute.xlu0 0
        %365 = vperm.xlu0 %364, %v335
        %v366 = vpop.permute.xlu0 %365
        %369 = vset.pattern.permute.xlu0 0
        %370 = vperm.xlu0 %369, %v336
        %v371 = vpop.permute.xlu0 %370
        %374 = vset.pattern.permute.xlu0 0
        %375 = vperm.xlu0 %374, %v337
        %v376 = vpop.permute.xlu0 %375
        %379 = vset.pattern.permute.xlu0 0
        %380 = vperm.xlu0 %379, %v338
        %v381 = vpop.permute.xlu0 %380
        %384 = vset.pattern.permute.xlu0 0
        %385 = vperm.xlu0 %384, %v339
        %v386 = vpop.permute.xlu0 %385
        %389 = vset.pattern.permute.xlu0 0
        %390 = vperm.xlu0 %389, %v340
        %v391 = vpop.permute.xlu0 %390
        %394 = vset.pattern.permute.xlu0 0
        %395 = vperm.xlu0 %394, %v341
        %v396 = vpop.permute.xlu0 %395
        %399 = vset.pattern.permute.xlu0 0
        %400 = vperm.xlu0 %399, %v342
        %v401 = vpop.permute.xlu0 %400
        %404 = vset.pattern.permute.xlu0 0
        %405 = vperm.xlu0 %404, %v343
        %v406 = vpop.permute.xlu0 %405
        %409 = vset.pattern.permute.xlu0 0
        %410 = vperm.xlu0 %409, %v344
        %v411 = vpop.permute.xlu0 %410
        %414 = vset.pattern.permute.xlu0 0
        %415 = vperm.xlu0 %414, %v345
        %v416 = vpop.permute.xlu0 %415
        %419 = vset.pattern.permute.xlu0 0
        %420 = vperm.xlu0 %419, %v346
        %v421 = vpop.permute.xlu0 %420
        %424 = vset.pattern.permute.xlu0 0
        %425 = vperm.xlu0 %424, %v347
        %v426 = vpop.permute.xlu0 %425
        %vm428 = vcmask 64512
        %v430 = vsel %vm428, %v316, 0
        %v433 = vsel %vm428, %v317, 0
        %v436 = vsel %vm428, %v318, 0
        %v439 = vsel %vm428, %v319, 0
        %v442 = vsel %vm428, %v320, 0
        %v445 = vsel %vm428, %v321, 0
        %v448 = vsel %vm428, %v322, 0
        %v451 = vsel %vm428, %v323, 0
        %v454 = vsel %vm428, %v324, 0
        %v457 = vsel %vm428, %v325, 0
        %v460 = vsel %vm428, %v326, 0
        %v463 = vsel %vm428, %v327, 0
        %v466 = vsel %vm428, %v328, 0
        %v469 = vsel %vm428, %v329, 0
        %v472 = vsel %vm428, %v330, 0
        %v475 = vsel %vm428, %v331, 0
        %v478 = vsel %vm428, %v300, 0
        %v481 = vsel %vm428, %v301, 0
        %v484 = vsel %vm428, %v302, 0
        %v487 = vsel %vm428, %v303, 0
        %v490 = vsel %vm428, %v304, 0
        %v493 = vsel %vm428, %v305, 0
        %v496 = vsel %vm428, %v306, 0
        %v499 = vsel %vm428, %v307, 0
        %v502 = vsel %vm428, %v308, 0
        %v505 = vsel %vm428, %v309, 0
        %v508 = vsel %vm428, %v310, 0
        %v511 = vsel %vm428, %v311, 0
        %v514 = vsel %vm428, %v312, 0
        %v517 = vsel %vm428, %v313, 0
        %v520 = vsel %vm428, %v314, 0
        %v523 = vsel %vm428, %v315, 0
        %525 = vmatprep.subr.mxu0 0.0
        %526 = vmatpush1.xpose.msra.mxu0 %v523
        %527 = vmatprep.subr.mxu0 0.0
        %528 = vmatpush1.xpose.msra.mxu0 %v520
        %529 = vmatprep.subr.mxu0 0.0
        %530 = vmatpush1.xpose.msra.mxu0 %v517
        %531 = vmatprep.subr.mxu0 0.0
        %532 = vmatpush1.xpose.msra.mxu0 %v514
        %533 = vmatprep.subr.mxu0 0.0
        %534 = vmatpush1.xpose.msra.mxu0 %v511
        %535 = vmatprep.subr.mxu0 0.0
        %536 = vmatpush1.xpose.msra.mxu0 %v508
        %537 = vmatprep.subr.mxu0 0.0
        %538 = vmatpush1.xpose.msra.mxu0 %v505
        %539 = vmatprep.subr.mxu0 0.0
        %540 = vmatpush1.xpose.msra.mxu0 %v502
        %541 = vmatprep.subr.mxu0 0.0
        %542 = vmatpush1.xpose.msra.mxu0 %v499
        %543 = vmatprep.subr.mxu0 0.0
        %544 = vmatpush1.xpose.msra.mxu0 %v496
        %545 = vmatprep.subr.mxu0 0.0
        %546 = vmatpush1.xpose.msra.mxu0 %v493
        %547 = vmatprep.subr.mxu0 0.0
        %548 = vmatpush1.xpose.msra.mxu0 %v490
        %549 = vmatprep.subr.mxu0 0.0
        %550 = vmatpush1.xpose.msra.mxu0 %v487
        %551 = vmatprep.subr.mxu0 0.0
        %552 = vmatpush1.xpose.msra.mxu0 %v484
        %553 = vmatprep.subr.mxu0 0.0
        %554 = vmatpush1.xpose.msra.mxu0 %v481
        %555 = vmatprep.subr.mxu0 0.0
        %556 = vmatpush1.xpose.msra.mxu0 %v478
        %557 = vmatprep.subr.mxu0 0.0
        %558 = vmatpush2.xpose.msra.mxu0 0.0
        %559 = vmatprep.subr.mxu0 0.0
        %560 = vmatpush2.xpose.msra.mxu0 0.0
        %561 = vmatprep.subr.mxu0 0.0
        %562 = vmatpush2.xpose.msra.mxu0 0.0
        %563 = vmatprep.subr.mxu0 0.0
        %564 = vmatpush2.xpose.msra.mxu0 0.0
        %565 = vmatprep.subr.mxu0 0.0
        %566 = vmatpush2.xpose.msra.mxu0 0.0
        %567 = vmatprep.subr.mxu0 0.0
        %568 = vmatpush2.xpose.msra.mxu0 0.0
        %569 = vmatprep.subr.mxu0 0.0
        %570 = vmatpush2.xpose.msra.mxu0 0.0
        %571 = vmatprep.subr.mxu0 0.0
        %572 = vmatpush2.xpose.msra.mxu0 0.0
        %573 = vmatprep.subr.mxu0 0.0
        %574 = vmatpush2.xpose.msra.mxu0 0.0
        %575 = vmatprep.subr.mxu0 0.0
        %576 = vmatpush2.xpose.msra.mxu0 0.0
        %577 = vmatprep.subr.mxu0 0.0
        %578 = vmatpush2.xpose.msra.mxu0 0.0
        %579 = vmatprep.subr.mxu0 0.0
        %580 = vmatpush2.xpose.msra.mxu0 0.0
        %581 = vmatprep.subr.mxu0 0.0
        %582 = vmatpush2.xpose.msra.mxu0 0.0
        %583 = vmatprep.subr.mxu0 0.0
        %584 = vmatpush2.xpose.msra.mxu0 0.0
        %585 = vmatprep.subr.mxu0 0.0
        %586 = vmatpush2.xpose.msra.mxu0 0.0
        %587 = vmatprep.subr.mxu0 0.0
        %588 = vmatpush2.xpose.msra.mxu0 0.0
        %589 = vmatprep.mubr.f32.mxu0 0.0
        %590 = vmatmul.mubr.f32.gmra.mxu0 %v430
        %v591 = vpop.f32.mrf.mxu0
        %v592 = vadd.f32 %v351, %v591
        %v593 = vpop.f32.mrf.mxu0
        %594 = vmatprep.mubr.f32.mxu0 0.0
        %595 = vmatmul.mubr.f32.gmra.mxu0 %v433
        %v596 = vpop.f32.mrf.mxu0
        %v597 = vadd.f32 %v356, %v596
        %v598 = vpop.f32.mrf.mxu0
        %599 = vmatprep.mubr.f32.mxu0 0.0
        %600 = vmatmul.mubr.f32.gmra.mxu0 %v436
        %v601 = vpop.f32.mrf.mxu0
        %v602 = vadd.f32 %v361, %v601
        %v603 = vpop.f32.mrf.mxu0
        %604 = vmatprep.mubr.f32.mxu0 0.0
        %605 = vmatmul.mubr.f32.gmra.mxu0 %v439
        %v606 = vpop.f32.mrf.mxu0
        %v607 = vadd.f32 %v366, %v606
        %v608 = vpop.f32.mrf.mxu0
        %609 = vmatprep.mubr.f32.mxu0 0.0
        %610 = vmatmul.mubr.f32.gmra.mxu0 %v442
        %v611 = vpop.f32.mrf.mxu0
        %v612 = vadd.f32 %v371, %v611
        %v613 = vpop.f32.mrf.mxu0
        %614 = vmatprep.mubr.f32.mxu0 0.0
        %615 = vmatmul.mubr.f32.gmra.mxu0 %v445
        %v616 = vpop.f32.mrf.mxu0
        %v617 = vadd.f32 %v376, %v616
        %v618 = vpop.f32.mrf.mxu0
        %619 = vmatprep.mubr.f32.mxu0 0.0
        %620 = vmatmul.mubr.f32.gmra.mxu0 %v448
        %v621 = vpop.f32.mrf.mxu0
        %v622 = vadd.f32 %v381, %v621
        %v623 = vpop.f32.mrf.mxu0
        %624 = vmatprep.mubr.f32.mxu0 0.0
        %625 = vmatmul.mubr.f32.gmra.mxu0 %v451
        %v626 = vpop.f32.mrf.mxu0
        %v627 = vadd.f32 %v386, %v626
        %v628 = vpop.f32.mrf.mxu0
        %629 = vmatprep.mubr.f32.mxu0 0.0
        %630 = vmatmul.mubr.f32.gmra.mxu0 %v454
        %v631 = vpop.f32.mrf.mxu0
        %v632 = vadd.f32 %v391, %v631
        %v633 = vpop.f32.mrf.mxu0
        %634 = vmatprep.mubr.f32.mxu0 0.0
        %635 = vmatmul.mubr.f32.gmra.mxu0 %v457
        %v636 = vpop.f32.mrf.mxu0
        %v637 = vadd.f32 %v396, %v636
        %v638 = vpop.f32.mrf.mxu0
        %639 = vmatprep.mubr.f32.mxu0 0.0
        %640 = vmatmul.mubr.f32.gmra.mxu0 %v460
        %v641 = vpop.f32.mrf.mxu0
        %v642 = vadd.f32 %v401, %v641
        %v643 = vpop.f32.mrf.mxu0
        %644 = vmatprep.mubr.f32.mxu0 0.0
        %645 = vmatmul.mubr.f32.gmra.mxu0 %v463
        %v646 = vpop.f32.mrf.mxu0
        %v647 = vadd.f32 %v406, %v646
        %v648 = vpop.f32.mrf.mxu0
        %649 = vmatprep.mubr.f32.mxu0 0.0
        %650 = vmatmul.mubr.f32.gmra.mxu0 %v466
        %v651 = vpop.f32.mrf.mxu0
        %v652 = vadd.f32 %v411, %v651
        %v653 = vpop.f32.mrf.mxu0
        %654 = vmatprep.mubr.f32.mxu0 0.0
        %655 = vmatmul.mubr.f32.gmra.mxu0 %v469
        %v656 = vpop.f32.mrf.mxu0
        %v657 = vadd.f32 %v416, %v656
        %v658 = vpop.f32.mrf.mxu0
        %659 = vmatprep.mubr.f32.mxu0 0.0
        %660 = vmatmul.mubr.f32.gmra.mxu0 %v472
        %v661 = vpop.f32.mrf.mxu0
        %v662 = vadd.f32 %v421, %v661
        %v663 = vpop.f32.mrf.mxu0
        %664 = vmatprep.mubr.f32.mxu0 0.0
        %665 = vmatmul.mubr.f32.gmra.mxu0 %v475
        %v666 = vpop.f32.mrf.mxu0
        %v667 = vadd.f32 %v426, %v666
        %v668 = vpop.f32.mrf.mxu0
        %669 = vdwg.mxu0
        %v670 = vmax.f32 %v592, 0.0
        %v671 = vmax.f32 %v597, 0.0
        %v672 = vmax.f32 %v602, 0.0
        %v673 = vmax.f32 %v607, 0.0
        %v674 = vmax.f32 %v612, 0.0
        %v675 = vmax.f32 %v617, 0.0
        %v676 = vmax.f32 %v622, 0.0
        %v677 = vmax.f32 %v627, 0.0
        %v678 = vmax.f32 %v632, 0.0
        %v679 = vmax.f32 %v637, 0.0
        %v680 = vmax.f32 %v642, 0.0
        %v681 = vmax.f32 %v647, 0.0
        %v682 = vmax.f32 %v652, 0.0
        %v683 = vmax.f32 %v657, 0.0
        %v684 = vmax.f32 %v662, 0.0
        %v685 = vmax.f32 %v667, 0.0
        %v686 = vld [vmem:[%s3] sm:$0xff]
        %v687 = vld [vmem:[%s3 + $0x8] sm:$0xff]
        %v688 = vld [vmem:[%s3 + $0x10] sm:$0xff]
        %v689 = vld [vmem:[%s3 + $0x18] sm:$0xff]
        %v690 = vld [vmem:[%s3 + $0x20] sm:$0xff]
        %v691 = vld [vmem:[%s3 + $0x28] sm:$0xff]
        %v692 = vld [vmem:[%s3 + $0x30] sm:$0xff]
        %v693 = vld [vmem:[%s3 + $0x38] sm:$0xff]
        %v694 = vld [vmem:[%s4] sm:$0xff]
        %v695 = vld [vmem:[%s4 + $0x8] sm:$0xff]
        %v696 = vld [vmem:[%s4 + $0x10] sm:$0xff]
        %v697 = vld [vmem:[%s4 + $0x18] sm:$0xff]
        %v698 = vld [vmem:[%s4 + $0x20] sm:$0xff]
        %v699 = vld [vmem:[%s4 + $0x28] sm:$0xff]
        %v700 = vld [vmem:[%s4 + $0x30] sm:$0xff]
        %v701 = vld [vmem:[%s4 + $0x38] sm:$0xff]
        %703 = vset.pattern.permute.xlu0 0
        %704 = vperm.xlu0 %703, %v694
        %v705 = vpop.permute.xlu0 %704
        %708 = vset.pattern.permute.xlu0 0
        %709 = vperm.xlu0 %708, %v695
        %v710 = vpop.permute.xlu0 %709
        %713 = vset.pattern.permute.xlu0 0
        %714 = vperm.xlu0 %713, %v696
        %v715 = vpop.permute.xlu0 %714
        %718 = vset.pattern.permute.xlu0 0
        %719 = vperm.xlu0 %718, %v697
        %v720 = vpop.permute.xlu0 %719
        %723 = vset.pattern.permute.xlu0 0
        %724 = vperm.xlu0 %723, %v698
        %v725 = vpop.permute.xlu0 %724
        %728 = vset.pattern.permute.xlu0 0
        %729 = vperm.xlu0 %728, %v699
        %v730 = vpop.permute.xlu0 %729
        %733 = vset.pattern.permute.xlu0 0
        %734 = vperm.xlu0 %733, %v700
        %v735 = vpop.permute.xlu0 %734
        %738 = vset.pattern.permute.xlu0 0
        %739 = vperm.xlu0 %738, %v701
        %v740 = vpop.permute.xlu0 %739
        %742 = vmatprep.subr.mxu0 0.0
        %743 = vmatpush1.msra.mxu0 %v685
        %744 = vmatprep.subr.mxu0 0.0
        %745 = vmatpush1.msra.mxu0 %v684
        %746 = vmatprep.subr.mxu0 0.0
        %747 = vmatpush1.msra.mxu0 %v683
        %748 = vmatprep.subr.mxu0 0.0
        %749 = vmatpush1.msra.mxu0 %v682
        %750 = vmatprep.subr.mxu0 0.0
        %751 = vmatpush1.msra.mxu0 %v681
        %752 = vmatprep.subr.mxu0 0.0
        %753 = vmatpush1.msra.mxu0 %v680
        %754 = vmatprep.subr.mxu0 0.0
        %755 = vmatpush1.msra.mxu0 %v679
        %756 = vmatprep.subr.mxu0 0.0
        %757 = vmatpush1.msra.mxu0 %v678
        %758 = vmatprep.subr.mxu0 0.0
        %759 = vmatpush1.msra.mxu0 %v677
        %760 = vmatprep.subr.mxu0 0.0
        %761 = vmatpush1.msra.mxu0 %v676
        %762 = vmatprep.subr.mxu0 0.0
        %763 = vmatpush1.msra.mxu0 %v675
        %764 = vmatprep.subr.mxu0 0.0
        %765 = vmatpush1.msra.mxu0 %v674
        %766 = vmatprep.subr.mxu0 0.0
        %767 = vmatpush1.msra.mxu0 %v673
        %768 = vmatprep.subr.mxu0 0.0
        %769 = vmatpush1.msra.mxu0 %v672
        %770 = vmatprep.subr.mxu0 0.0
        %771 = vmatpush1.msra.mxu0 %v671
        %772 = vmatprep.subr.mxu0 0.0
        %773 = vmatpush1.msra.mxu0 %v670
        %774 = vmatprep.subr.mxu0 0.0
        %775 = vmatpush2.msra.mxu0 0.0
        %776 = vmatprep.subr.mxu0 0.0
        %777 = vmatpush2.msra.mxu0 0.0
        %778 = vmatprep.subr.mxu0 0.0
        %779 = vmatpush2.msra.mxu0 0.0
        %780 = vmatprep.subr.mxu0 0.0
        %781 = vmatpush2.msra.mxu0 0.0
        %782 = vmatprep.subr.mxu0 0.0
        %783 = vmatpush2.msra.mxu0 0.0
        %784 = vmatprep.subr.mxu0 0.0
        %785 = vmatpush2.msra.mxu0 0.0
        %786 = vmatprep.subr.mxu0 0.0
        %787 = vmatpush2.msra.mxu0 0.0
        %788 = vmatprep.subr.mxu0 0.0
        %789 = vmatpush2.msra.mxu0 0.0
        %790 = vmatprep.subr.mxu0 0.0
        %791 = vmatpush2.msra.mxu0 0.0
        %792 = vmatprep.subr.mxu0 0.0
        %793 = vmatpush2.msra.mxu0 0.0
        %794 = vmatprep.subr.mxu0 0.0
        %795 = vmatpush2.msra.mxu0 0.0
        %796 = vmatprep.subr.mxu0 0.0
        %797 = vmatpush2.msra.mxu0 0.0
        %798 = vmatprep.subr.mxu0 0.0
        %799 = vmatpush2.msra.mxu0 0.0
        %800 = vmatprep.subr.mxu0 0.0
        %801 = vmatpush2.msra.mxu0 0.0
        %802 = vmatprep.subr.mxu0 0.0
        %803 = vmatpush2.msra.mxu0 0.0
        %804 = vmatprep.subr.mxu0 0.0
        %805 = vmatpush2.msra.mxu0 0.0
        %806 = vmatprep.mubr.f32.mxu0 0.0
        %807 = vmatmul.mubr.f32.gmra.mxu0 %v686
        %v808 = vpop.f32.mrf.mxu0
        %v809 = vadd.f32 %v705, %v808
        %v810 = vpop.f32.mrf.mxu0
        %811 = vmatprep.mubr.f32.mxu0 0.0
        %812 = vmatmul.mubr.f32.gmra.mxu0 %v687
        %v813 = vpop.f32.mrf.mxu0
        %v814 = vadd.f32 %v710, %v813
        %v815 = vpop.f32.mrf.mxu0
        %816 = vmatprep.mubr.f32.mxu0 0.0
        %817 = vmatmul.mubr.f32.gmra.mxu0 %v688
        %v818 = vpop.f32.mrf.mxu0
        %v819 = vadd.f32 %v715, %v818
        %v820 = vpop.f32.mrf.mxu0
        %821 = vmatprep.mubr.f32.mxu0 0.0
        %822 = vmatmul.mubr.f32.gmra.mxu0 %v689
        %v823 = vpop.f32.mrf.mxu0
        %v824 = vadd.f32 %v720, %v823
        %v825 = vpop.f32.mrf.mxu0
        %826 = vmatprep.mubr.f32.mxu0 0.0
        %827 = vmatmul.mubr.f32.gmra.mxu0 %v690
        %v828 = vpop.f32.mrf.mxu0
        %v829 = vadd.f32 %v725, %v828
        %v830 = vpop.f32.mrf.mxu0
        %831 = vmatprep.mubr.f32.mxu0 0.0
        %832 = vmatmul.mubr.f32.gmra.mxu0 %v691
        %v833 = vpop.f32.mrf.mxu0
        %v834 = vadd.f32 %v730, %v833
        %v835 = vpop.f32.mrf.mxu0
        %836 = vmatprep.mubr.f32.mxu0 0.0
        %837 = vmatmul.mubr.f32.gmra.mxu0 %v692
        %v838 = vpop.f32.mrf.mxu0
        %v839 = vadd.f32 %v735, %v838
        %v840 = vpop.f32.mrf.mxu0
        %841 = vmatprep.mubr.f32.mxu0 0.0
        %842 = vmatmul.mubr.f32.gmra.mxu0 %v693
        %v843 = vpop.f32.mrf.mxu0
        %v844 = vadd.f32 %v740, %v843
        %v845 = vpop.f32.mrf.mxu0
        %846 = vdwg.mxu0
        %v847 = vmax.f32 %v809, 0.0
        %v848 = vmax.f32 %v814, 0.0
        %v849 = vmax.f32 %v819, 0.0
        %v850 = vmax.f32 %v824, 0.0
        %v851 = vmax.f32 %v829, 0.0
        %v852 = vmax.f32 %v834, 0.0
        %v853 = vmax.f32 %v839, 0.0
        %v854 = vmax.f32 %v844, 0.0
        %v855 = vld [vmem:[%s5] sm:$0xff]
        %v856 = vld [vmem:[%s5 + $0x8] sm:$0xff]
        %v857 = vld [vmem:[%s5 + $0x10] sm:$0xff]
        %v858 = vld [vmem:[%s5 + $0x18] sm:$0xff]
        %v859 = vld [vmem:[%s5 + $0x20] sm:$0xff]
        %v860 = vld [vmem:[%s5 + $0x28] sm:$0xff]
        %v861 = vld [vmem:[%s5 + $0x30] sm:$0xff]
        %v862 = vld [vmem:[%s5 + $0x38] sm:$0xff]
        %864 = vset.pattern.permute.xlu0 0
        %865 = vperm.xlu0 %864, %v855
        %v866 = vpop.permute.xlu0 %865
        %869 = vset.pattern.permute.xlu0 0
        %870 = vperm.xlu0 %869, %v856
        %v871 = vpop.permute.xlu0 %870
        %874 = vset.pattern.permute.xlu0 0
        %875 = vperm.xlu0 %874, %v857
        %v876 = vpop.permute.xlu0 %875
        %879 = vset.pattern.permute.xlu0 0
        %880 = vperm.xlu0 %879, %v858
        %v881 = vpop.permute.xlu0 %880
        %884 = vset.pattern.permute.xlu0 0
        %885 = vperm.xlu0 %884, %v859
        %v886 = vpop.permute.xlu0 %885
        %889 = vset.pattern.permute.xlu0 0
        %890 = vperm.xlu0 %889, %v860
        %v891 = vpop.permute.xlu0 %890
        %894 = vset.pattern.permute.xlu0 0
        %895 = vperm.xlu0 %894, %v861
        %v896 = vpop.permute.xlu0 %895
        %899 = vset.pattern.permute.xlu0 0
        %900 = vperm.xlu0 %899, %v862
        %v901 = vpop.permute.xlu0 %900
        %v903 = vmul.f32 %v866, %v847
        %v904 = vmul.f32 %v871, %v848
        %v905 = vmul.f32 %v876, %v849
        %v906 = vmul.f32 %v881, %v850
        %v907 = vmul.f32 %v886, %v851
        %v908 = vmul.f32 %v891, %v852
        %v909 = vmul.f32 %v896, %v853
        %v910 = vmul.f32 %v901, %v854
        %v911 = vadd.f32 %v903, %v904
        %v912 = vadd.f32 %v911, %v905
        %v913 = vadd.f32 %v912, %v906
        %v914 = vadd.f32 %v913, %v907
        %v915 = vadd.f32 %v914, %v908
        %v916 = vadd.f32 %v915, %v909
        %v917 = vadd.f32 %v916, %v910
        %v918 = vrot.slane %v917, 4
        %v919 = vadd.f32 %v917, %v918
        %v920 = vrot.slane %v919, 2
        %v921 = vadd.f32 %v919, %v920
        %v922 = vrot.slane %v921, 1
        %v923 = vadd.f32 %v921, %v922
        %v924 = vld [vmem:[#allocation2] sm:$0x1]
        %926 = vset.pattern.permute.xlu0 0
        %927 = vperm.xlu0 %926, %v924
        %v928 = vpop.permute.xlu0 %927
        %v930 = vlaneseq
        %v931 = vshrl.u32 %v930, 7
        %v932 = vsub.s32 0, %v931
        %v933 = vrot.slane %v928, %v932
        %v934 = vadd.f32 %v923, %v933
        %935 = vst [vmem:[%s285] sm:$0x1] %v934
        %s936 = sand.u32 %s183, 1
        %s937 = scalar_lea.sflag [#allocation4], %s936
        %s938 = sand.u32 %s183, 1
        %s939 = scalar_lea.vmem [#allocation3], %s938
        // Predicated region
        $region49: #{tpu_custom_call.1} parent=47 // pred_check
          %p940 = pneg %p193
        $region50: #{tpu_custom_call.1} parent=47 // pred_check_branch
          %942 = sbr.rel (%p940) target = $region52
        $region51: #{tpu_custom_call.1} parent=47 // pred_region
          %s944 = ssub.s32 16, 16
          %945 = vsyncadd %s937, %s944
          %s946 = smul.addr %s23, 16
          %s947 = scalar_lea.hbm %s7, %s946
          %s949 = sshll.u32 %s939, 4
          %s950 = int_to_ptr.vmem [resolvable:$true] %s949
          %952 = dma.vmem_to_hbm [thread:$0]  %s950, 16, %s947, %s937
        $region52: #{tpu_custom_call.1} parent=47 // pred_fallthru
          _
      $region48: #{tpu_custom_call.1} parent=5 // pred_fallthru
        _
      %p953 = scmp.le.s32.totalorder 2, %s18
      // Predicated region
      $region53: #{tpu_custom_call.1} parent=5 // pred_check
        %p954 = pneg %p953
      $region54: #{tpu_custom_call.1} parent=5 // pred_check_branch
        %956 = sbr.rel (%p954) target = $region56
      $region55: #{tpu_custom_call.1} parent=5 // pred_region
        %s957 = ssub.s32 %s18, 2
        // Predicated region
        $region57: #{tpu_custom_call.1} parent=55 // pred_check
          %p958 = pneg %p199
        $region58: #{tpu_custom_call.1} parent=55 // pred_check_branch
          %960 = sbr.rel (%p958) target = $region60
        $region59: #{tpu_custom_call.1} parent=55 // pred_region
          %s961 = sand.u32 %s184, 1
          %s962 = scalar_lea.sflag [#allocation4], %s961
          %s963 = sand.u32 %s184, 1
          %s964 = scalar_lea.vmem [#allocation3], %s963
          %965 = dma.done %s962, 16
        $region60: #{tpu_custom_call.1} parent=55 // pred_fallthru
          _
      $region56: #{tpu_custom_call.1} parent=5 // pred_fallthru
        _
    $region6: #{tpu_custom_call.1} parent=1 // loop_footer
      %s22 = sadd.s32 1, %s18
    $region7: #{tpu_custom_call.1} parent=1 // loop_footer_branch
      %17 = sbr.rel target = $region3
    $region8: #{tpu_custom_call.1} parent=1 // loop_exit
      _
    %966 = vsyncpa [#allocation4], 1
    %s967 = scalar_lea.sflag [#allocation4], 1
    %968 = vsyncpa %s967, 1

</llo_original>
